<compile_context>
chip_gen: v7x
topology: tpu7x:2x2x1
jax: 0.10.0
libtpu: 0.0.40
codegen_flags: <defaults>
</compile_context>

<pallas_src>
import functools

import jax
import jax.numpy as jnp
from jax.experimental import pallas as pl
from jax.experimental.pallas import tpu as pltpu

BN_EPS = 1e-5


# --------------------------------------------------------------------------
# Kernels
# --------------------------------------------------------------------------
def _linear_bn_relu(x_ref, mask_ref, w1_ref, bn_ref, inv_b):
    """Linear(in, H-tile) + train-mode BatchNorm1d + ReLU for one H tile.

    bn_ref packs [b1; gamma; beta] as rows 0..2 of an (8, tile_h) f32 block.
    Batch stats use a masked ones-row matmul on the MXU so padded batch rows
    contribute nothing; var = E[h^2] - mean^2 (clamped at 0) keeps the two
    stats matmuls independent and avoids a centered temporary.
    """
    h = jnp.dot(x_ref[...], w1_ref[...], preferred_element_type=jnp.float32)
    h = h + bn_ref[0:1, :]                                      # + b1
    ones = mask_ref[...]                                        # (1, Bp) f32
    mean = jnp.dot(ones, h, preferred_element_type=jnp.float32) * inv_b
    ex2 = jnp.dot(ones, h * h, preferred_element_type=jnp.float32) * inv_b
    var = jnp.maximum(ex2 - mean * mean, 0.0)                   # clamp for rsqrt
    scale = bn_ref[1:2, :] * jax.lax.rsqrt(var + BN_EPS)        # gamma * rsqrt
    shift = bn_ref[2:3, :] - mean * scale                       # beta - mean*scale
    return jnp.maximum(h * scale + shift, 0.0)                  # (Bp, tile_h) f32


def fused_mlp_kernel(x_ref, mask_ref, w1_ref, bn_ref, w2_ref, b2_ref,
                     o_ref, acc_ref, *, inv_b):
    """Single-pass path.  Grid = (H tiles,) reduction; full (Bp, Pp) acc."""
    h_idx = pl.program_id(0)

    @pl.when(h_idx == 0)
    def _():
        # Fold b2 into the accumulator init (removes the finalize-path add).
        acc_ref[...] = jnp.broadcast_to(b2_ref[...], acc_ref.shape)

    a = _linear_bn_relu(x_ref, mask_ref, w1_ref, bn_ref, inv_b)
    acc_ref[...] += jnp.dot(a.astype(w2_ref.dtype), w2_ref[...],
                            preferred_element_type=jnp.float32)

    @pl.when(h_idx == pl.num_programs(0) - 1)
    def _():
        o_ref[...] = acc_ref[...].astype(o_ref.dtype)


def act_kernel(x_ref, mask_ref, w1_ref, bn_ref, a_ref, *, inv_b):
    """Two-pass path, stage 1: Linear1 + BN + ReLU, grid over H (parallel)."""
    a = _linear_bn_relu(x_ref, mask_ref, w1_ref, bn_ref, inv_b)
    a_ref[...] = a.astype(a_ref.dtype)


def matmul_bias_kernel(a_ref, w2_ref, b2_ref, o_ref, acc_ref):
    """Two-pass path, stage 2: tiled a @ w2 + b2.  Grid = (N, H-reduction)."""
    h_idx = pl.program_id(1)

    @pl.when(h_idx == 0)
    def _():
        acc_ref[...] = jnp.broadcast_to(b2_ref[...], acc_ref.shape)

    acc_ref[...] += jnp.dot(a_ref[...], w2_ref[...],
                            preferred_element_type=jnp.float32)

    @pl.when(h_idx == pl.num_programs(1) - 1)
    def _():
        o_ref[...] = acc_ref[...].astype(o_ref.dtype)


# --------------------------------------------------------------------------
# Wrapper
# --------------------------------------------------------------------------
def _round_up(v, m):
    return (v + m - 1) // m * m


def _pad2(a, rows, cols):
    return jnp.pad(a, ((0, rows - a.shape[0]), (0, cols - a.shape[1])))


def _vmem_budget_bytes():
    """~75% of this generation's physical VMEM (headroom for compiler scratch)."""
    phys = 64 * 1024 * 1024                       # conservative fallback (v7x)
    try:
        info = pltpu.get_tpu_info()
        phys = int(getattr(info, "vmem_capacity_bytes", phys))
    except Exception:
        pass
    return phys * 3 // 4


def _block_candidates(dim, preferred):
    """Lane-aligned tile sizes that divide `dim`, largest first (>=128)."""
    return sorted({c for c in (preferred, 512, 256, 128)
                   if 128 <= c <= dim and dim % c == 0 and c % 128 == 0},
                  reverse=True)


def mlp_forward(x, w1, b1, gamma, beta, w2, b2, *, compute_dtype=None,
                block_h=256, block_n=256, force_two_pass=False):
    """SimSiam MLP forward (depth=2, add_bn=False).

    x: (B, D); w1: (D, H); w2: (H, P); b1/gamma/beta: (1, H); b2: (1, P).
    Matmul operands default to bf16 (f32 accumulation, f32 BN/ReLU math).
    """
    B, D = x.shape
    H = w1.shape[1]
    P = w2.shape[1]
    out_dtype = x.dtype
    cd = jnp.bfloat16 if compute_dtype is None else compute_dtype

    # Pad to TPU-friendly shapes: batch -> multiple of 8 (sublane), feature
    # dims -> multiples of 128 (lane-dense stores, full MXU tiles).
    Bp = _round_up(B, 8)
    Dp = _round_up(D, 128)
    Hp = _round_up(H, 128)
    Pp = _round_up(P, 128)

    cd_b = jnp.dtype(cd).itemsize
    out_b = jnp.dtype(out_dtype).itemsize
    budget = _vmem_budget_bytes()
    h_cands = _block_candidates(Hp, block_h)
    n_cands = _block_candidates(Pp, block_n)

    # Packed / padded operands.  gamma pads with zeros so padded hidden
    # columns produce exactly-zero activations (-> contribute 0 to Linear2).
    xp = _pad2(x, Bp, Dp).astype(cd)
    w1p = _pad2(w1, Dp, Hp).astype(cd)
    w2p = _pad2(w2, Hp, Pp).astype(cd)
    bn_pack = jnp.zeros((8, Hp), jnp.float32)
    bn_pack = bn_pack.at[0, :H].set(b1.reshape(-1).astype(jnp.float32))
    bn_pack = bn_pack.at[1, :H].set(gamma.reshape(-1).astype(jnp.float32))
    bn_pack = bn_pack.at[2, :H].set(beta.reshape(-1).astype(jnp.float32))
    b2p = _pad2(b2.reshape(1, -1).astype(jnp.float32), 1, Pp)
    mask = (jnp.arange(Bp) < B).astype(jnp.float32).reshape(1, Bp)
    inv_b = 1.0 / B

    # Shape-derived VMEM estimates (double-buffered operands + f32 temps).
    def fused_bytes(bh):
        return (2 * (Bp * Dp * cd_b + Bp * 4 + Dp * bh * cd_b + 8 * bh * 4
                     + bh * Pp * cd_b + Pp * 4 + Bp * Pp * out_b)
                + Bp * Pp * 4 + 3 * Bp * bh * 4)

    def act_bytes(bh):
        return (2 * (Bp * Dp * cd_b + Bp * 4 + Dp * bh * cd_b + 8 * bh * 4
                     + Bp * bh * cd_b) + 3 * Bp * bh * 4)

    def mm_bytes(bh, bn_):
        return (2 * (Bp * bh * cd_b + bh * bn_ * cd_b + bn_ * 4
                     + Bp * bn_ * out_b) + Bp * bn_ * 4)

    fused_bh = None
    if not force_two_pass:
        fused_bh = next((c for c in h_cands if fused_bytes(c) <= budget), None)

    # ---------------- preferred: single fused pass over H ------------------
    if fused_bh is not None:
        bh = fused_bh
        out = pl.pallas_call(
            functools.partial(fused_mlp_kernel, inv_b=inv_b),
            grid=(Hp // bh,),
            in_specs=[
                pl.BlockSpec((Bp, Dp), lambda h: (0, 0)),        # x (resident)
                pl.BlockSpec((1, Bp), lambda h: (0, 0)),         # batch mask
                pl.BlockSpec((Dp, bh), lambda h: (0, h)),        # w1 tile
                pl.BlockSpec((8, bh), lambda h: (0, h)),         # [b1;gamma;beta]
                pl.BlockSpec((bh, Pp), lambda h: (h, 0)),        # w2 tile
                pl.BlockSpec((1, Pp), lambda h: (0, 0)),         # b2
            ],
            out_specs=pl.BlockSpec((Bp, Pp), lambda h: (0, 0)),
            out_shape=jax.ShapeDtypeStruct((Bp, Pp), out_dtype),
            scratch_shapes=[pltpu.VMEM((Bp, Pp), jnp.float32)],
            compiler_params=pltpu.CompilerParams(
                dimension_semantics=("arbitrary",),
                vmem_limit_bytes=budget),
        )(xp, mask, w1p, bn_pack, w2p, b2p)
        return out[:B, :P]

    # ---------------- fallback: activation once, then tiled a @ w2 ---------
    bh1 = next((c for c in h_cands if act_bytes(c) <= budget), h_cands[-1])
    a = pl.pallas_call(
        functools.partial(act_kernel, inv_b=inv_b),
        grid=(Hp // bh1,),
        in_specs=[
            pl.BlockSpec((Bp, Dp), lambda h: (0, 0)),            # x (resident)
            pl.BlockSpec((1, Bp), lambda h: (0, 0)),             # batch mask
            pl.BlockSpec((Dp, bh1), lambda h: (0, h)),           # w1 tile
            pl.BlockSpec((8, bh1), lambda h: (0, h)),            # [b1;gamma;beta]
        ],
        out_specs=pl.BlockSpec((Bp, bh1), lambda h: (0, h)),
        out_shape=jax.ShapeDtypeStruct((Bp, Hp), cd),
        compiler_params=pltpu.CompilerParams(
            dimension_semantics=("parallel",),
            vmem_limit_bytes=budget),
    )(xp, mask, w1p, bn_pack)

    # Keep block_n as large as possible; shrink block_h first if over budget.
    bh2, bn2 = h_cands[-1], n_cands[-1]
    chosen = False
    for n_c in n_cands:
        for h_c in h_cands:
            if mm_bytes(h_c, n_c) <= budget:
                bh2, bn2 = h_c, n_c
                chosen = True
                break
        if chosen:
            break

    out = pl.pallas_call(
        matmul_bias_kernel,
        grid=(Pp // bn2, Hp // bh2),
        in_specs=[
            pl.BlockSpec((Bp, bh2), lambda n, h: (0, h)),        # a tile
            pl.BlockSpec((bh2, bn2), lambda n, h: (h, n)),       # w2 tile
            pl.BlockSpec((1, bn2), lambda n, h: (0, n)),         # b2 tile
        ],
        out_specs=pl.BlockSpec((Bp, bn2), lambda n, h: (0, n)),
        out_shape=jax.ShapeDtypeStruct((Bp, Pp), out_dtype),
        scratch_shapes=[pltpu.VMEM((Bp, bn2), jnp.float32)],
        compiler_params=pltpu.CompilerParams(
            dimension_semantics=("parallel", "arbitrary"),
            vmem_limit_bytes=budget),
    )(a, w2p, b2p)
    return out[:B, :P]


# --------------------------------------------------------------------------
# Params / reference
# --------------------------------------------------------------------------
def init_params(key, input_size, hidden_size, projection_size):
    """Deterministic parameter init (PyTorch-style uniform bounds)."""
    k1, k2, k3, k4 = jax.random.split(key, 4)
    bound1 = 1.0 / jnp.sqrt(input_size)
    bound2 = 1.0 / jnp.sqrt(hidden_size)
    # stored transposed: [in, out]
    w1 = jax.random.uniform(k1, (input_size, hidden_size), jnp.float32,
                            -bound1, bound1)
    b1 = jax.random.uniform(k2, (1, hidden_size), jnp.float32, -bound1, bound1)
    gamma = jnp.ones((1, hidden_size), jnp.float32)   # BN weight init
    beta = jnp.zeros((1, hidden_size), jnp.float32)   # BN bias init
    w2 = jax.random.uniform(k3, (hidden_size, projection_size), jnp.float32,
                            -bound2, bound2)
    b2 = jax.random.uniform(k4, (1, projection_size), jnp.float32,
                            -bound2, bound2)
    return w1, b1, gamma, beta, w2, b2


def reference_forward(x, w1, b1, gamma, beta, w2, b2):
    """Pure-JAX reference of the same forward pass (full-precision matmuls)."""
    hp = jax.lax.Precision.HIGHEST
    h = jnp.dot(x, w1, precision=hp) + b1
    mean = jnp.mean(h, axis=0, keepdims=True)
    var = jnp.mean((h - mean) ** 2, axis=0, keepdims=True)
    h = (h - mean) / jnp.sqrt(var + BN_EPS) * gamma + beta
    h = jnp.maximum(h, 0.0)
    return jnp.dot(h, w2, precision=hp) + b2


if __name__ == "__main__":
    # Shapes consistent with MLP(input_size=32, hidden_size=64,
    # projection_size=16, depth=2, add_bn=False); batch=8.
    # NOTE: these are correctness smoke-test shapes only -- do not tune tile
    # sizes against them (everything pads to a single 8x128 grid cell).
    batch, input_size, hidden_size, projection_size = 8, 32, 64, 16

    key = jax.random.PRNGKey(0)
    kx, kp = jax.random.split(key)
    x = jax.random.normal(kx, (batch, input_size), jnp.float32)
    params = init_params(kp, input_size, hidden_size, projection_size)

    ref = reference_forward(x, *params)

    # f32 matmul operands (fused single-pass path at this size): tight check.
    out_f32 = jax.block_until_ready(
        mlp_forward(x, *params, compute_dtype=jnp.float32))
    assert out_f32.shape == (batch, projection_size)
    assert jnp.allclose(out_f32, ref, atol=2e-3, rtol=2e-3), \
        "f32 mismatch vs reference"

    # Default bf16 matmul operands (f32 accumulation / f32 BN math): loose
    # tolerance since operand rounding differs from the f32 reference.
    out_bf16 = jax.block_until_ready(mlp_forward(x, *params))
    assert out_bf16.shape == (batch, projection_size)
    assert jnp.allclose(out_bf16, ref, atol=1e-1, rtol=1e-1), \
        "bf16 mismatch vs reference"

    # Exercise the two-pass fallback (activation kernel + tiled matmul) too.
    out_2p = jax.block_until_ready(
        mlp_forward(x, *params, compute_dtype=jnp.float32,
                    force_two_pass=True))
    assert jnp.allclose(out_2p, ref, atol=2e-3, rtol=2e-3), \
        "two-pass mismatch vs reference"

    print("KERNEL_OK")
</pallas_src>

<mosaic_0001>
module attributes {stable_mosaic.version = 11 : i64} {
  func.func @fused_mlp_kernel(%arg0: i32, %arg1: memref<8x128xf32, #tpu.memory_space<vmem>>, %arg2: memref<1x8xf32, #tpu.memory_space<vmem>>, %arg3: memref<128x128xf32, #tpu.memory_space<vmem>>, %arg4: memref<8x128xf32, #tpu.memory_space<vmem>>, %arg5: memref<128x128xf32, #tpu.memory_space<vmem>>, %arg6: memref<1x128xf32, #tpu.memory_space<vmem>>, %arg7: memref<8x128xf32, #tpu.memory_space<vmem>>, %arg8: memref<8x128xf32, #tpu.memory_space<vmem>>) attributes {dimension_semantics = [#tpu.dimension_semantics<arbitrary>], iteration_bounds = array<i64: 1>, scalar_prefetch = 0 : i64, scratch_operands = 1 : i64, tpu.core_type = #tpu.core_type<tc>, window_params = [{pipeline_mode = #tpu.pipeline_mode<synchronous>, transform_indices = @transform_0, window_bounds = array<i64: 8, 128>}, {pipeline_mode = #tpu.pipeline_mode<synchronous>, transform_indices = @transform_1, window_bounds = array<i64: 1, 8>}, {transform_indices = @transform_2, window_bounds = array<i64: 128, 128>}, {transform_indices = @transform_3, window_bounds = array<i64: 8, 128>}, {transform_indices = @transform_4, window_bounds = array<i64: 128, 128>}, {pipeline_mode = #tpu.pipeline_mode<synchronous>, transform_indices = @transform_5, window_bounds = array<i64: 1, 128>}, {pipeline_mode = #tpu.pipeline_mode<synchronous>, transform_indices = @transform_6, window_bounds = array<i64: 8, 128>}]} {
    %c0_i32 = arith.constant 0 : i32
    %0 = arith.cmpi eq, %arg0, %c0_i32 : i32
    %1 = arith.extui %0 : i1 to i32
    %c0_i32_0 = arith.constant 0 : i32
    %2 = arith.cmpi ne, %1, %c0_i32_0 : i32
    scf.if %2 {
      %c0_26 = arith.constant 0 : index
      %c0_27 = arith.constant 0 : index
      %43 = vector.load %arg6[%c0_26, %c0_27] : memref<1x128xf32, #tpu.memory_space<vmem>>, vector<1x128xf32>
      %44 = vector.shape_cast %43 : vector<1x128xf32> to vector<1x128xf32>
      %45 = vector.broadcast %44 : vector<1x128xf32> to vector<8x128xf32>
      %c0_28 = arith.constant 0 : index
      %c0_29 = arith.constant 0 : index
      %46 = vector.load %arg8[%c0_28, %c0_29] : memref<8x128xf32, #tpu.memory_space<vmem>>, vector<8x128xf32>
      tpu.vector_store %arg8[%c0_28, %c0_29], %45 {strides = array<i32>} : memref<8x128xf32, #tpu.memory_space<vmem>>, vector<8x128xf32>,
    } else {
    }
    %c0 = arith.constant 0 : index
    %c0_1 = arith.constant 0 : index
    %3 = vector.load %arg1[%c0, %c0_1] : memref<8x128xf32, #tpu.memory_space<vmem>>, vector<8x128xf32>
    %c0_2 = arith.constant 0 : index
    %c0_3 = arith.constant 0 : index
    %4 = vector.load %arg3[%c0_2, %c0_3] : memref<128x128xf32, #tpu.memory_space<vmem>>, vector<128x128xf32>
    %cst = arith.constant dense<0.000000e+00> : vector<8x128xf32>
    %5 = tpu.matmul %3, %4, %cst {dimension_numbers = #tpu.dot_dimension_numbers<[1], [0], [0], [1], [0, 0, 1, 1], [], []>} : vector<8x128xf32>, vector<128x128xf32>, vector<8x128xf32> -> vector<8x128xf32>
    %c0_4 = arith.constant 0 : index
    %c0_5 = arith.constant 0 : index
    %6 = vector.load %arg4[%c0_4, %c0_5] : memref<8x128xf32, #tpu.memory_space<vmem>>, vector<1x128xf32>
    %7 = vector.broadcast %6 : vector<1x128xf32> to vector<8x128xf32>
    %8 = arith.addf %5, %7 : vector<8x128xf32>
    %c0_6 = arith.constant 0 : index
    %c0_7 = arith.constant 0 : index
    %9 = vector.load %arg2[%c0_6, %c0_7] : memref<1x8xf32, #tpu.memory_space<vmem>>, vector<1x8xf32>
    %cst_8 = arith.constant dense<0.000000e+00> : vector<1x128xf32>
    %10 = tpu.matmul %9, %8, %cst_8 {dimension_numbers = #tpu.dot_dimension_numbers<[1], [0], [0], [1], [0, 0, 1, 1], [], []>} : vector<1x8xf32>, vector<8x128xf32>, vector<1x128xf32> -> vector<1x128xf32>
    %cst_9 = arith.constant 1.250000e-01 : f32
    %11 = vector.broadcast %cst_9 : f32 to vector<1x128xf32>
    %12 = arith.mulf %10, %11 : vector<1x128xf32>
    %13 = arith.mulf %8, %8 : vector<8x128xf32>
    %cst_10 = arith.constant dense<0.000000e+00> : vector<1x128xf32>
    %14 = tpu.matmul %9, %13, %cst_10 {dimension_numbers = #tpu.dot_dimension_numbers<[1], [0], [0], [1], [0, 0, 1, 1], [], []>} : vector<1x8xf32>, vector<8x128xf32>, vector<1x128xf32> -> vector<1x128xf32>
    %cst_11 = arith.constant 1.250000e-01 : f32
    %15 = vector.broadcast %cst_11 : f32 to vector<1x128xf32>
    %16 = arith.mulf %14, %15 : vector<1x128xf32>
    %17 = arith.mulf %12, %12 : vector<1x128xf32>
    %18 = arith.subf %16, %17 : vector<1x128xf32>
    %cst_12 = arith.constant 0.000000e+00 : f32
    %19 = vector.broadcast %cst_12 : f32 to vector<1x128xf32>
    %20 = arith.maximumf %18, %19 : vector<1x128xf32>
    %c1 = arith.constant 1 : index
    %c0_13 = arith.constant 0 : index
    %21 = vector.load %arg4[%c1, %c0_13] : memref<8x128xf32, #tpu.memory_space<vmem>>, vector<1x128xf32>
    %cst_14 = arith.constant 9.99999974E-6 : f32
    %22 = vector.broadcast %cst_14 : f32 to vector<1x128xf32>
    %23 = arith.addf %20, %22 : vector<1x128xf32>
    %24 = math.rsqrt %23 : vector<1x128xf32>
    %25 = arith.mulf %21, %24 : vector<1x128xf32>
    %c2 = arith.constant 2 : index
    %c0_15 = arith.constant 0 : index
    %26 = vector.load %arg4[%c2, %c0_15] : memref<8x128xf32, #tpu.memory_space<vmem>>, vector<1x128xf32>
    %27 = arith.mulf %12, %25 : vector<1x128xf32>
    %28 = arith.subf %26, %27 : vector<1x128xf32>
    %29 = vector.broadcast %25 : vector<1x128xf32> to vector<8x128xf32>
    %30 = arith.mulf %8, %29 : vector<8x128xf32>
    %31 = vector.broadcast %28 : vector<1x128xf32> to vector<8x128xf32>
    %32 = arith.addf %30, %31 : vector<8x128xf32>
    %cst_16 = arith.constant 0.000000e+00 : f32
    %33 = vector.broadcast %cst_16 : f32 to vector<8x128xf32>
    %34 = arith.maximumf %32, %33 : vector<8x128xf32>
    %c0_17 = arith.constant 0 : index
    %c0_18 = arith.constant 0 : index
    %35 = vector.load %arg8[%c0_17, %c0_18] : memref<8x128xf32, #tpu.memory_space<vmem>>, vector<8x128xf32>
    %c0_19 = arith.constant 0 : index
    %c0_20 = arith.constant 0 : index
    %36 = vector.load %arg5[%c0_19, %c0_20] : memref<128x128xf32, #tpu.memory_space<vmem>>, vector<128x128xf32>
    %cst_21 = arith.constant dense<0.000000e+00> : vector<8x128xf32>
    %37 = tpu.matmul %34, %36, %cst_21 {dimension_numbers = #tpu.dot_dimension_numbers<[1], [0], [0], [1], [0, 0, 1, 1], [], []>} : vector<8x128xf32>, vector<128x128xf32>, vector<8x128xf32> -> vector<8x128xf32>
    %38 = arith.addf %35, %37 : vector<8x128xf32>
    %c0_22 = arith.constant 0 : index
    %c0_23 = arith.constant 0 : index
    %39 = vector.load %arg8[%c0_22, %c0_23] : memref<8x128xf32, #tpu.memory_space<vmem>>, vector<8x128xf32>
    tpu.vector_store %arg8[%c0_22, %c0_23], %38 {strides = array<i32>} : memref<8x128xf32, #tpu.memory_space<vmem>>, vector<8x128xf32>,
    %c0_i32_24 = arith.constant 0 : i32
    %40 = arith.cmpi eq, %arg0, %c0_i32_24 : i32
    %41 = arith.extui %40 : i1 to i32
    %c0_i32_25 = arith.constant 0 : i32
    %42 = arith.cmpi ne, %41, %c0_i32_25 : i32
    scf.if %42 {
      %c0_26 = arith.constant 0 : index
      %c0_27 = arith.constant 0 : index
      %43 = vector.load %arg8[%c0_26, %c0_27] : memref<8x128xf32, #tpu.memory_space<vmem>>, vector<8x128xf32>
      %c0_28 = arith.constant 0 : index
      %c0_29 = arith.constant 0 : index
      %44 = vector.load %arg7[%c0_28, %c0_29] : memref<8x128xf32, #tpu.memory_space<vmem>>, vector<8x128xf32>
      tpu.vector_store %arg7[%c0_28, %c0_29], %43 {strides = array<i32>} : memref<8x128xf32, #tpu.memory_space<vmem>>, vector<8x128xf32>,
    } else {
    }
    return
  }
  func.func @transform_0(%arg0: i32) -> (i32, i32) {
    %c0_i32 = arith.constant 0 : i32
    %c0_i32_0 = arith.constant 0 : i32
    %c0_i32_1 = arith.constant 0 : i32
    return %c0_i32, %c0_i32_0 : i32, i32
  }
  func.func @transform_1(%arg0: i32) -> (i32, i32) {
    %c0_i32 = arith.constant 0 : i32
    %c0_i32_0 = arith.constant 0 : i32
    %c0_i32_1 = arith.constant 0 : i32
    return %c0_i32, %c0_i32_0 : i32, i32
  }
  func.func @transform_2(%arg0: i32) -> (i32, i32) {
    %c0_i32 = arith.constant 0 : i32
    %c0_i32_0 = arith.constant 0 : i32
    return %c0_i32, %arg0 : i32, i32
  }
  func.func @transform_3(%arg0: i32) -> (i32, i32) {
    %c0_i32 = arith.constant 0 : i32
    %c0_i32_0 = arith.constant 0 : i32
    return %c0_i32, %arg0 : i32, i32
  }
  func.func @transform_4(%arg0: i32) -> (i32, i32) {
    %c0_i32 = arith.constant 0 : i32
    %c0_i32_0 = arith.constant 0 : i32
    return %arg0, %c0_i32 : i32, i32
  }
  func.func @transform_5(%arg0: i32) -> (i32, i32) {
    %c0_i32 = arith.constant 0 : i32
    %c0_i32_0 = arith.constant 0 : i32
    %c0_i32_1 = arith.constant 0 : i32
    return %c0_i32, %c0_i32_0 : i32, i32
  }
  func.func @transform_6(%arg0: i32) -> (i32, i32) {
    %c0_i32 = arith.constant 0 : i32
    %c0_i32_0 = arith.constant 0 : i32
    %c0_i32_1 = arith.constant 0 : i32
    return %c0_i32, %c0_i32_0 : i32, i32
  }
}

</mosaic_0001>

<llo_original>
// kernel: tpu_custom_call.1
$region0: #{tpu_custom_call.1}
  #allocation0 [shape = 'u32[]', space=smem, size = 0x4, offset = 0x4, fixed_abs, tag = 'smem constant byte address 0x4 - core index']
  #allocation1 [shape = 'u32[144,128]{1,0:T(1,128)}', space=vmem, size = 0x12000, scoped, tag = 'internal scratch']
  #allocation2 [shape = 'f32[8,128]{1,0:T(8,128)}', space=vmem, size = 0x1000, scoped, tag = 'scratch operand']
  %s0 = inlined_call_operand.hbm [shape: f32[8,128], index: 0, kind: input, shape index: {}]
  %s1 = inlined_call_operand.vmem [shape: f32[1,8], index: 1, kind: input, shape index: {}]
  %s2 = inlined_call_operand.hbm [shape: f32[128,128], index: 2, kind: input, shape index: {}]
  %s3 = inlined_call_operand.vmem [shape: f32[8,128], index: 3, kind: input, shape index: {}]
  %s4 = inlined_call_operand.hbm [shape: f32[128,128], index: 4, kind: input, shape index: {}]
  %s5 = inlined_call_operand.vmem [shape: f32[1,128], index: 5, kind: input, shape index: {}]
  %s6 = inlined_call_operand.hbm [shape: f32[8,128], index: 6, kind: output, shape index: {}]
  %s7 = sld [smem:[#allocation0]]
  $region54: #{tpu_custom_call.1} parent=0
    _
  %s9 = ssub.s32 1, %s7
  %s10 = scalar_select 0, %s9, %s7
  $region1: #{tpu_custom_call.1} parent=0
    #allocation3 [shape = 'u8[4096]{0}', space=vmem, size = 0x1000, scoped, tag = 'input window, operand 0, single buffered']
    #allocation4 [shape = 's32[1]{0}', space=sflag, size = 0x4, scoped, tag = 'scoped memory for tpu_custom_call.1']
    #allocation5 [shape = 's32[1]{0}', space=sflag, size = 0x4, scoped, tag = 'scoped memory for tpu_custom_call.1']
    #allocation6 [shape = 'u8[65536]{0}', space=vmem, size = 0x10000, scoped, tag = 'input window, operand 2, single buffered']
    #allocation7 [shape = 's32[1]{0}', space=sflag, size = 0x4, scoped, tag = 'scoped memory for tpu_custom_call.1']
    #allocation8 [shape = 'u8[65536]{0}', space=vmem, size = 0x10000, scoped, tag = 'input window, operand 4, single buffered']
    #allocation9 [shape = 'u8[4096]{0}', space=vmem, size = 0x1000, scoped, tag = 'output window, operand 0, single buffered']
    %11 = vsyncpa [#allocation4], 0
    %12 = vsyncpa [#allocation7], 0
    %13 = vsyncpa [#allocation5], 0
    // Predicated region
    $region2: #{tpu_custom_call.1} parent=1 // pred_check
      _
    $region3: #{tpu_custom_call.1} parent=1 // pred_check_branch
      %15 = sbr.rel (0) target = $region5
    $region4: #{tpu_custom_call.1} parent=1 // pred_region
      %s17 = ssub.s32 128, 128
      %18 = vsyncadd [#allocation4], %s17
      %s20 = sshll.u32 [#allocation3], 4
      %s21 = int_to_ptr.vmem [resolvable:$true] %s20
      %23 = dma.hbm_to_vmem [thread:$0]  %s0, 128, %s21, [#allocation4]
    $region5: #{tpu_custom_call.1} parent=1 // pred_fallthru
      _
    // Predicated region
    $region6: #{tpu_custom_call.1} parent=1 // pred_check
      _
    $region7: #{tpu_custom_call.1} parent=1 // pred_check_branch
      %25 = sbr.rel (0) target = $region9
    $region8: #{tpu_custom_call.1} parent=1 // pred_region
      _
    $region9: #{tpu_custom_call.1} parent=1 // pred_fallthru
      _
    // Predicated region
    $region10: #{tpu_custom_call.1} parent=1 // pred_check
      _
    $region11: #{tpu_custom_call.1} parent=1 // pred_check_branch
      %27 = sbr.rel (0) target = $region13
    $region12: #{tpu_custom_call.1} parent=1 // pred_region
      %s29 = ssub.s32 2048, 2048
      %30 = vsyncadd [#allocation7], %s29
      %s31 = sshll.u32 [#allocation6], 4
      %s32 = int_to_ptr.vmem [resolvable:$true] %s31
      %37 = dma.hbm_to_vmem [thread:$0]  %s2, 2048, %s32, [#allocation7], 128, 128, 8
    $region13: #{tpu_custom_call.1} parent=1 // pred_fallthru
      _
    // Predicated region
    $region14: #{tpu_custom_call.1} parent=1 // pred_check
      _
    $region15: #{tpu_custom_call.1} parent=1 // pred_check_branch
      %39 = sbr.rel (0) target = $region17
    $region16: #{tpu_custom_call.1} parent=1 // pred_region
      _
    $region17: #{tpu_custom_call.1} parent=1 // pred_fallthru
      _
    // Predicated region
    $region18: #{tpu_custom_call.1} parent=1 // pred_check
      _
    $region19: #{tpu_custom_call.1} parent=1 // pred_check_branch
      %41 = sbr.rel (0) target = $region21
    $region20: #{tpu_custom_call.1} parent=1 // pred_region
      %s43 = ssub.s32 2048, 2048
      %44 = vsyncadd [#allocation7], %s43
      %s45 = sshll.u32 [#allocation8], 4
      %s46 = int_to_ptr.vmem [resolvable:$true] %s45
      %51 = dma.hbm_to_vmem [thread:$0]  %s4, 2048, %s46, [#allocation7], 128, 128, 8
    $region21: #{tpu_custom_call.1} parent=1 // pred_fallthru
      _
    // Predicated region
    $region22: #{tpu_custom_call.1} parent=1 // pred_check
      _
    $region23: #{tpu_custom_call.1} parent=1 // pred_check_branch
      %53 = sbr.rel (0) target = $region25
    $region24: #{tpu_custom_call.1} parent=1 // pred_region
      _
    $region25: #{tpu_custom_call.1} parent=1 // pred_fallthru
      _
    // Predicated region
    $region26: #{tpu_custom_call.1} parent=1 // pred_check
      _
    $region27: #{tpu_custom_call.1} parent=1 // pred_check_branch
      %55 = sbr.rel (0) target = $region29
    $region28: #{tpu_custom_call.1} parent=1 // pred_region
      %56 = dma.done [#allocation4], 128
    $region29: #{tpu_custom_call.1} parent=1 // pred_fallthru
      _
    // Predicated region
    $region30: #{tpu_custom_call.1} parent=1 // pred_check
      _
    $region31: #{tpu_custom_call.1} parent=1 // pred_check_branch
      %58 = sbr.rel (0) target = $region33
    $region32: #{tpu_custom_call.1} parent=1 // pred_region
      %59 = dma.done [#allocation7], 2048
    $region33: #{tpu_custom_call.1} parent=1 // pred_fallthru
      _
    // Predicated region
    $region34: #{tpu_custom_call.1} parent=1 // pred_check
      _
    $region35: #{tpu_custom_call.1} parent=1 // pred_check_branch
      %61 = sbr.rel (0) target = $region37
    $region36: #{tpu_custom_call.1} parent=1 // pred_region
      %62 = dma.done [#allocation7], 2048
    $region37: #{tpu_custom_call.1} parent=1 // pred_fallthru
      _
    %p63 = scmp.eq.s32.totalorder 0, 0
    // Predicated region
    $region38: #{tpu_custom_call.1} parent=1 // pred_check
      %p64 = pneg %p63
    $region39: #{tpu_custom_call.1} parent=1 // pred_check_branch
      %66 = sbr.rel (%p64) target = $region41
    $region40: #{tpu_custom_call.1} parent=1 // pred_region
      %v67 = vld [vmem:[%s5] sm:$0x1]
      %v69 = vlaneseq
      %v70 = vshrl.u32 %v69, 7
      %v71 = vsub.s32 0, %v70
      %v72 = vrot.slane %v67, %v71
      %74 = vst [vmem:[#allocation2] sm:$0xff] %v72
    $region41: #{tpu_custom_call.1} parent=1 // pred_fallthru
      _
    %v75 = vld [vmem:[#allocation3] sm:$0xff]
    %v76 = vld [vmem:[#allocation6] sm:$0xff]
    %v77 = vld [vmem:[#allocation6 + $0x8] sm:$0xff]
    %v78 = vld [vmem:[#allocation6 + $0x10] sm:$0xff]
    %v79 = vld [vmem:[#allocation6 + $0x18] sm:$0xff]
    %v80 = vld [vmem:[#allocation6 + $0x20] sm:$0xff]
    %v81 = vld [vmem:[#allocation6 + $0x28] sm:$0xff]
    %v82 = vld [vmem:[#allocation6 + $0x30] sm:$0xff]
    %v83 = vld [vmem:[#allocation6 + $0x38] sm:$0xff]
    %v84 = vld [vmem:[#allocation6 + $0x40] sm:$0xff]
    %v85 = vld [vmem:[#allocation6 + $0x48] sm:$0xff]
    %v86 = vld [vmem:[#allocation6 + $0x50] sm:$0xff]
    %v87 = vld [vmem:[#allocation6 + $0x58] sm:$0xff]
    %v88 = vld [vmem:[#allocation6 + $0x60] sm:$0xff]
    %v89 = vld [vmem:[#allocation6 + $0x68] sm:$0xff]
    %v90 = vld [vmem:[#allocation6 + $0x70] sm:$0xff]
    %v91 = vld [vmem:[#allocation6 + $0x78] sm:$0xff]
    %v92 = vld [vmem:[%s3] sm:$0x1]
    %v93 = vlaneseq
    %v94 = vshrl.u32 %v93, 7
    %v95 = vsub.s32 0, %v94
    %v96 = vrot.slane %v92, %v95
    %97 = vmatprep.subr.mxu0 0.0
    %98 = vmatpush1.msra.mxu0 %v76
    %99 = vmatprep.subr.mxu0 0.0
    %100 = vmatpush1.msra.mxu0 %v77
    %101 = vmatprep.subr.mxu0 0.0
    %102 = vmatpush1.msra.mxu0 %v78
    %103 = vmatprep.subr.mxu0 0.0
    %104 = vmatpush1.msra.mxu0 %v79
    %105 = vmatprep.subr.mxu0 0.0
    %106 = vmatpush1.msra.mxu0 %v80
    %107 = vmatprep.subr.mxu0 0.0
    %108 = vmatpush1.msra.mxu0 %v81
    %109 = vmatprep.subr.mxu0 0.0
    %110 = vmatpush1.msra.mxu0 %v82
    %111 = vmatprep.subr.mxu0 0.0
    %112 = vmatpush1.msra.mxu0 %v83
    %113 = vmatprep.subr.mxu0 0.0
    %114 = vmatpush1.msra.mxu0 %v84
    %115 = vmatprep.subr.mxu0 0.0
    %116 = vmatpush1.msra.mxu0 %v85
    %117 = vmatprep.subr.mxu0 0.0
    %118 = vmatpush1.msra.mxu0 %v86
    %119 = vmatprep.subr.mxu0 0.0
    %120 = vmatpush1.msra.mxu0 %v87
    %121 = vmatprep.subr.mxu0 0.0
    %122 = vmatpush1.msra.mxu0 %v88
    %123 = vmatprep.subr.mxu0 0.0
    %124 = vmatpush1.msra.mxu0 %v89
    %125 = vmatprep.subr.mxu0 0.0
    %126 = vmatpush1.msra.mxu0 %v90
    %127 = vmatprep.subr.mxu0 0.0
    %128 = vmatpush1.msra.mxu0 %v91
    %129 = vmatprep.subr.mxu0 0.0
    %130 = vmatpush1.msra.mxu0 0.0
    %131 = vmatprep.subr.mxu0 0.0
    %132 = vmatpush1.msra.mxu0 0.0
    %133 = vmatprep.subr.mxu0 0.0
    %134 = vmatpush1.msra.mxu0 0.0
    %135 = vmatprep.subr.mxu0 0.0
    %136 = vmatpush1.msra.mxu0 0.0
    %137 = vmatprep.subr.mxu0 0.0
    %138 = vmatpush1.msra.mxu0 0.0
    %139 = vmatprep.subr.mxu0 0.0
    %140 = vmatpush1.msra.mxu0 0.0
    %141 = vmatprep.subr.mxu0 0.0
    %142 = vmatpush1.msra.mxu0 0.0
    %143 = vmatprep.subr.mxu0 0.0
    %144 = vmatpush1.msra.mxu0 0.0
    %145 = vmatprep.subr.mxu0 0.0
    %146 = vmatpush1.msra.mxu0 0.0
    %147 = vmatprep.subr.mxu0 0.0
    %148 = vmatpush1.msra.mxu0 0.0
    %149 = vmatprep.subr.mxu0 0.0
    %150 = vmatpush1.msra.mxu0 0.0
    %151 = vmatprep.subr.mxu0 0.0
    %152 = vmatpush1.msra.mxu0 0.0
    %153 = vmatprep.subr.mxu0 0.0
    %154 = vmatpush1.msra.mxu0 0.0
    %155 = vmatprep.subr.mxu0 0.0
    %156 = vmatpush1.msra.mxu0 0.0
    %157 = vmatprep.subr.mxu0 0.0
    %158 = vmatpush1.msra.mxu0 0.0
    %159 = vmatprep.subr.mxu0 0.0
    %160 = vmatpush1.msra.mxu0 0.0
    %161 = vmatprep.mubr.f32.mxu0 0.0
    %162 = vmatmul.mubr.f32.gmra.mrb[0].mxu0 %v75
    %v163 = vpop.f32.mrb[0].mxu0
    %v164 = vadd.f32 %v96, %v163
    %v165 = vpop.f32.mrb[0].mxu0
    %166 = vdwg.mxu0
    %v167 = vld [vmem:[%s1] sm:$0x1]
    %vm168 = vcmask 64512
    %v170 = vsel %vm168, %v167, 0
    %172 = vmatprep.subr.mxu0 0.0
    %173 = vmatpush1.msra.mxu0 %v164
    %174 = vmatprep.subr.mxu0 0.0
    %175 = vmatpush1.msra.mxu0 0.0
    %176 = vmatprep.subr.mxu0 0.0
    %177 = vmatpush1.msra.mxu0 0.0
    %178 = vmatprep.subr.mxu0 0.0
    %179 = vmatpush1.msra.mxu0 0.0
    %180 = vmatprep.subr.mxu0 0.0
    %181 = vmatpush1.msra.mxu0 0.0
    %182 = vmatprep.subr.mxu0 0.0
    %183 = vmatpush1.msra.mxu0 0.0
    %184 = vmatprep.subr.mxu0 0.0
    %185 = vmatpush1.msra.mxu0 0.0
    %186 = vmatprep.subr.mxu0 0.0
    %187 = vmatpush1.msra.mxu0 0.0
    %188 = vmatprep.subr.mxu0 0.0
    %189 = vmatpush1.msra.mxu0 0.0
    %190 = vmatprep.subr.mxu0 0.0
    %191 = vmatpush1.msra.mxu0 0.0
    %192 = vmatprep.subr.mxu0 0.0
    %193 = vmatpush1.msra.mxu0 0.0
    %194 = vmatprep.subr.mxu0 0.0
    %195 = vmatpush1.msra.mxu0 0.0
    %196 = vmatprep.subr.mxu0 0.0
    %197 = vmatpush1.msra.mxu0 0.0
    %198 = vmatprep.subr.mxu0 0.0
    %199 = vmatpush1.msra.mxu0 0.0
    %200 = vmatprep.subr.mxu0 0.0
    %201 = vmatpush1.msra.mxu0 0.0
    %202 = vmatprep.subr.mxu0 0.0
    %203 = vmatpush1.msra.mxu0 0.0
    %204 = vmatprep.subr.mxu0 0.0
    %205 = vmatpush1.msra.mxu0 0.0
    %206 = vmatprep.subr.mxu0 0.0
    %207 = vmatpush1.msra.mxu0 0.0
    %208 = vmatprep.subr.mxu0 0.0
    %209 = vmatpush1.msra.mxu0 0.0
    %210 = vmatprep.subr.mxu0 0.0
    %211 = vmatpush1.msra.mxu0 0.0
    %212 = vmatprep.subr.mxu0 0.0
    %213 = vmatpush1.msra.mxu0 0.0
    %214 = vmatprep.subr.mxu0 0.0
    %215 = vmatpush1.msra.mxu0 0.0
    %216 = vmatprep.subr.mxu0 0.0
    %217 = vmatpush1.msra.mxu0 0.0
    %218 = vmatprep.subr.mxu0 0.0
    %219 = vmatpush1.msra.mxu0 0.0
    %220 = vmatprep.subr.mxu0 0.0
    %221 = vmatpush1.msra.mxu0 0.0
    %222 = vmatprep.subr.mxu0 0.0
    %223 = vmatpush1.msra.mxu0 0.0
    %224 = vmatprep.subr.mxu0 0.0
    %225 = vmatpush1.msra.mxu0 0.0
    %226 = vmatprep.subr.mxu0 0.0
    %227 = vmatpush1.msra.mxu0 0.0
    %228 = vmatprep.subr.mxu0 0.0
    %229 = vmatpush1.msra.mxu0 0.0
    %230 = vmatprep.subr.mxu0 0.0
    %231 = vmatpush1.msra.mxu0 0.0
    %232 = vmatprep.subr.mxu0 0.0
    %233 = vmatpush1.msra.mxu0 0.0
    %234 = vmatprep.subr.mxu0 0.0
    %235 = vmatpush1.msra.mxu0 0.0
    %236 = vmatprep.mubr.f32.mxu0 0.0
    %237 = vmatmul.mubr.f32.gmra.mrb[0].mxu0 %v170
    %v238 = vpop.f32.mrb[0].mxu0
    %v239 = vadd.f32 0.0, %v238
    %v240 = vpop.f32.mrb[0].mxu0
    %241 = vdwg.mxu0
    %v242 = vmul.f32 %v239, 0.125
    %v243 = vmul.f32 %v164, %v164
    %244 = vmatprep.subr.mxu0 0.0
    %245 = vmatpush1.msra.mxu0 %v243
    %246 = vmatprep.subr.mxu0 0.0
    %247 = vmatpush1.msra.mxu0 0.0
    %248 = vmatprep.subr.mxu0 0.0
    %249 = vmatpush1.msra.mxu0 0.0
    %250 = vmatprep.subr.mxu0 0.0
    %251 = vmatpush1.msra.mxu0 0.0
    %252 = vmatprep.subr.mxu0 0.0
    %253 = vmatpush1.msra.mxu0 0.0
    %254 = vmatprep.subr.mxu0 0.0
    %255 = vmatpush1.msra.mxu0 0.0
    %256 = vmatprep.subr.mxu0 0.0
    %257 = vmatpush1.msra.mxu0 0.0
    %258 = vmatprep.subr.mxu0 0.0
    %259 = vmatpush1.msra.mxu0 0.0
    %260 = vmatprep.subr.mxu0 0.0
    %261 = vmatpush1.msra.mxu0 0.0
    %262 = vmatprep.subr.mxu0 0.0
    %263 = vmatpush1.msra.mxu0 0.0
    %264 = vmatprep.subr.mxu0 0.0
    %265 = vmatpush1.msra.mxu0 0.0
    %266 = vmatprep.subr.mxu0 0.0
    %267 = vmatpush1.msra.mxu0 0.0
    %268 = vmatprep.subr.mxu0 0.0
    %269 = vmatpush1.msra.mxu0 0.0
    %270 = vmatprep.subr.mxu0 0.0
    %271 = vmatpush1.msra.mxu0 0.0
    %272 = vmatprep.subr.mxu0 0.0
    %273 = vmatpush1.msra.mxu0 0.0
    %274 = vmatprep.subr.mxu0 0.0
    %275 = vmatpush1.msra.mxu0 0.0
    %276 = vmatprep.subr.mxu0 0.0
    %277 = vmatpush1.msra.mxu0 0.0
    %278 = vmatprep.subr.mxu0 0.0
    %279 = vmatpush1.msra.mxu0 0.0
    %280 = vmatprep.subr.mxu0 0.0
    %281 = vmatpush1.msra.mxu0 0.0
    %282 = vmatprep.subr.mxu0 0.0
    %283 = vmatpush1.msra.mxu0 0.0
    %284 = vmatprep.subr.mxu0 0.0
    %285 = vmatpush1.msra.mxu0 0.0
    %286 = vmatprep.subr.mxu0 0.0
    %287 = vmatpush1.msra.mxu0 0.0
    %288 = vmatprep.subr.mxu0 0.0
    %289 = vmatpush1.msra.mxu0 0.0
    %290 = vmatprep.subr.mxu0 0.0
    %291 = vmatpush1.msra.mxu0 0.0
    %292 = vmatprep.subr.mxu0 0.0
    %293 = vmatpush1.msra.mxu0 0.0
    %294 = vmatprep.subr.mxu0 0.0
    %295 = vmatpush1.msra.mxu0 0.0
    %296 = vmatprep.subr.mxu0 0.0
    %297 = vmatpush1.msra.mxu0 0.0
    %298 = vmatprep.subr.mxu0 0.0
    %299 = vmatpush1.msra.mxu0 0.0
    %300 = vmatprep.subr.mxu0 0.0
    %301 = vmatpush1.msra.mxu0 0.0
    %302 = vmatprep.subr.mxu0 0.0
    %303 = vmatpush1.msra.mxu0 0.0
    %304 = vmatprep.subr.mxu0 0.0
    %305 = vmatpush1.msra.mxu0 0.0
    %306 = vmatprep.subr.mxu0 0.0
    %307 = vmatpush1.msra.mxu0 0.0
    %308 = vmatprep.mubr.f32.mxu0 0.0
    %309 = vmatmul.mubr.f32.gmra.mrb[0].mxu0 %v170
    %v310 = vpop.f32.mrb[0].mxu0
    %v311 = vadd.f32 0.0, %v310
    %v312 = vpop.f32.mrb[0].mxu0
    %313 = vdwg.mxu0
    %v314 = vmul.f32 %v311, 0.125
    %v315 = vmul.f32 %v242, %v242
    %v316 = vsub.f32 %v314, %v315
    %v317 = vmax.f32 %v316, 0.0
    %v318 = vld [vmem:[%s3 + $0x1] sm:$0x1]
    %v319 = vadd.f32 %v317, 1e-05
    %v320 = vrsqrt.pop %v319
    %v321 = vmul.f32 %v318, %v320
    %v322 = vld [vmem:[%s3 + $0x2] sm:$0x1]
    %v323 = vmul.f32 %v242, %v321
    %v324 = vsub.f32 %v322, %v323
    %v325 = vlaneseq
    %v326 = vshrl.u32 %v325, 7
    %v327 = vsub.s32 0, %v326
    %v328 = vrot.slane %v321, %v327
    %v329 = vmul.f32 %v164, %v328
    %v330 = vlaneseq
    %v331 = vshrl.u32 %v330, 7
    %v332 = vsub.s32 0, %v331
    %v333 = vrot.slane %v324, %v332
    %v334 = vadd.f32 %v329, %v333
    %v335 = vmax.f32 %v334, 0.0
    %v336 = vld [vmem:[#allocation2] sm:$0xff]
    %v337 = vld [vmem:[#allocation8] sm:$0xff]
    %v338 = vld [vmem:[#allocation8 + $0x8] sm:$0xff]
    %v339 = vld [vmem:[#allocation8 + $0x10] sm:$0xff]
    %v340 = vld [vmem:[#allocation8 + $0x18] sm:$0xff]
    %v341 = vld [vmem:[#allocation8 + $0x20] sm:$0xff]
    %v342 = vld [vmem:[#allocation8 + $0x28] sm:$0xff]
    %v343 = vld [vmem:[#allocation8 + $0x30] sm:$0xff]
    %v344 = vld [vmem:[#allocation8 + $0x38] sm:$0xff]
    %v345 = vld [vmem:[#allocation8 + $0x40] sm:$0xff]
    %v346 = vld [vmem:[#allocation8 + $0x48] sm:$0xff]
    %v347 = vld [vmem:[#allocation8 + $0x50] sm:$0xff]
    %v348 = vld [vmem:[#allocation8 + $0x58] sm:$0xff]
    %v349 = vld [vmem:[#allocation8 + $0x60] sm:$0xff]
    %v350 = vld [vmem:[#allocation8 + $0x68] sm:$0xff]
    %v351 = vld [vmem:[#allocation8 + $0x70] sm:$0xff]
    %v352 = vld [vmem:[#allocation8 + $0x78] sm:$0xff]
    %353 = vmatprep.subr.mxu0 0.0
    %354 = vmatpush1.msra.mxu0 %v337
    %355 = vmatprep.subr.mxu0 0.0
    %356 = vmatpush1.msra.mxu0 %v338
    %357 = vmatprep.subr.mxu0 0.0
    %358 = vmatpush1.msra.mxu0 %v339
    %359 = vmatprep.subr.mxu0 0.0
    %360 = vmatpush1.msra.mxu0 %v340
    %361 = vmatprep.subr.mxu0 0.0
    %362 = vmatpush1.msra.mxu0 %v341
    %363 = vmatprep.subr.mxu0 0.0
    %364 = vmatpush1.msra.mxu0 %v342
    %365 = vmatprep.subr.mxu0 0.0
    %366 = vmatpush1.msra.mxu0 %v343
    %367 = vmatprep.subr.mxu0 0.0
    %368 = vmatpush1.msra.mxu0 %v344
    %369 = vmatprep.subr.mxu0 0.0
    %370 = vmatpush1.msra.mxu0 %v345
    %371 = vmatprep.subr.mxu0 0.0
    %372 = vmatpush1.msra.mxu0 %v346
    %373 = vmatprep.subr.mxu0 0.0
    %374 = vmatpush1.msra.mxu0 %v347
    %375 = vmatprep.subr.mxu0 0.0
    %376 = vmatpush1.msra.mxu0 %v348
    %377 = vmatprep.subr.mxu0 0.0
    %378 = vmatpush1.msra.mxu0 %v349
    %379 = vmatprep.subr.mxu0 0.0
    %380 = vmatpush1.msra.mxu0 %v350
    %381 = vmatprep.subr.mxu0 0.0
    %382 = vmatpush1.msra.mxu0 %v351
    %383 = vmatprep.subr.mxu0 0.0
    %384 = vmatpush1.msra.mxu0 %v352
    %385 = vmatprep.subr.mxu0 0.0
    %386 = vmatpush1.msra.mxu0 0.0
    %387 = vmatprep.subr.mxu0 0.0
    %388 = vmatpush1.msra.mxu0 0.0
    %389 = vmatprep.subr.mxu0 0.0
    %390 = vmatpush1.msra.mxu0 0.0
    %391 = vmatprep.subr.mxu0 0.0
    %392 = vmatpush1.msra.mxu0 0.0
    %393 = vmatprep.subr.mxu0 0.0
    %394 = vmatpush1.msra.mxu0 0.0
    %395 = vmatprep.subr.mxu0 0.0
    %396 = vmatpush1.msra.mxu0 0.0
    %397 = vmatprep.subr.mxu0 0.0
    %398 = vmatpush1.msra.mxu0 0.0
    %399 = vmatprep.subr.mxu0 0.0
    %400 = vmatpush1.msra.mxu0 0.0
    %401 = vmatprep.subr.mxu0 0.0
    %402 = vmatpush1.msra.mxu0 0.0
    %403 = vmatprep.subr.mxu0 0.0
    %404 = vmatpush1.msra.mxu0 0.0
    %405 = vmatprep.subr.mxu0 0.0
    %406 = vmatpush1.msra.mxu0 0.0
    %407 = vmatprep.subr.mxu0 0.0
    %408 = vmatpush1.msra.mxu0 0.0
    %409 = vmatprep.subr.mxu0 0.0
    %410 = vmatpush1.msra.mxu0 0.0
    %411 = vmatprep.subr.mxu0 0.0
    %412 = vmatpush1.msra.mxu0 0.0
    %413 = vmatprep.subr.mxu0 0.0
    %414 = vmatpush1.msra.mxu0 0.0
    %415 = vmatprep.subr.mxu0 0.0
    %416 = vmatpush1.msra.mxu0 0.0
    %417 = vmatprep.mubr.f32.mxu0 0.0
    %418 = vmatmul.mubr.f32.gmra.mrb[0].mxu0 %v335
    %v419 = vpop.f32.mrb[0].mxu0
    %v420 = vadd.f32 0.0, %v419
    %v421 = vpop.f32.mrb[0].mxu0
    %422 = vdwg.mxu0
    %v423 = vadd.f32 %v336, %v420
    %424 = vst [vmem:[#allocation2] sm:$0xff] %v423
    // Predicated region
    $region42: #{tpu_custom_call.1} parent=1 // pred_check
      %p425 = pneg %p63
    $region43: #{tpu_custom_call.1} parent=1 // pred_check_branch
      %427 = sbr.rel (%p425) target = $region45
    $region44: #{tpu_custom_call.1} parent=1 // pred_region
      %v428 = vld [vmem:[#allocation2] sm:$0xff]
      %429 = vst [vmem:[#allocation9] sm:$0xff] %v428
    $region45: #{tpu_custom_call.1} parent=1 // pred_fallthru
      _
    // Predicated region
    $region46: #{tpu_custom_call.1} parent=1 // pred_check
      _
    $region47: #{tpu_custom_call.1} parent=1 // pred_check_branch
      %431 = sbr.rel (0) target = $region49
    $region48: #{tpu_custom_call.1} parent=1 // pred_region
      %s433 = ssub.s32 128, 128
      %434 = vsyncadd [#allocation5], %s433
      %s436 = sshll.u32 [#allocation9], 4
      %s437 = int_to_ptr.vmem [resolvable:$true] %s436
      %439 = dma.vmem_to_hbm [thread:$0]  %s437, 128, %s6, [#allocation5]
    $region49: #{tpu_custom_call.1} parent=1 // pred_fallthru
      _
    // Predicated region
    $region50: #{tpu_custom_call.1} parent=1 // pred_check
      _
    $region51: #{tpu_custom_call.1} parent=1 // pred_check_branch
      %441 = sbr.rel (0) target = $region53
    $region52: #{tpu_custom_call.1} parent=1 // pred_region
      %442 = dma.done [#allocation5], 128
    $region53: #{tpu_custom_call.1} parent=1 // pred_fallthru
      _
    %443 = vsyncpa [#allocation4], 1
    %444 = vsyncpa [#allocation7], 1
    %445 = vsyncpa [#allocation5], 1

</llo_original>
